<compile_context>
chip_gen: v5e
topology: v5e:2x2
jax: 0.10.0
libtpu: 0.0.40
codegen_flags: <defaults>
</compile_context>

<pallas_src>
import functools

import jax
import jax.numpy as jnp
from jax.experimental import pallas as pl
from jax.experimental.pallas import tpu as pltpu


def _cdiv(a, b):
    return (a + b - 1) // b


def _center_loss_kernel(o_ref, t_ref, out_ref, acc_ref, *,
                        steps_per_chunk, tile_rows, lane, n_rows, needs_mask):
    k = pl.program_id(1)

    # Reset the vector accumulator at the start of each chunk's reduction.
    @pl.when(k == 0)
    def _():
        acc_ref[...] = jnp.zeros_like(acc_ref)

    d = o_ref[...].astype(jnp.float32) - t_ref[...].astype(jnp.float32)

    if needs_mask:
        # Zero out rows past the end of the (n_rows, lane) array (partial last
        # block / redundant clamped block) BEFORE squaring, so they add exactly 0.
        c = pl.program_id(0)
        g = c * steps_per_chunk + k
        row_ids = (jax.lax.broadcasted_iota(jnp.int32, (tile_rows, lane), 0)
                   + g * tile_rows)
        d = jnp.where(row_ids < n_rows, d, 0.0)

    # Pure-VPU accumulation each step; hides under the HBM DMA.
    acc_ref[...] += d * d

    # Finalize this chunk: single cross-lane reduction, write partial sum.
    @pl.when(k == pl.num_programs(1) - 1)
    def _():
        total = jnp.sum(acc_ref[...])
        out_ref[...] = jnp.zeros(out_ref.shape, jnp.float32) + total


def center_loss(outputs, targets):
    """sum((outputs - targets)**2) / outputs.shape[0], computed in Pallas."""
    assert outputs.shape == targets.shape
    b = outputs.shape[0]

    o = outputs.reshape(-1)
    t = targets.reshape(-1)
    n = o.shape[0]

    # Lane width: largest of {512, 256, 128} dividing N (no padding needed).
    lane = None
    for cand in (512, 256, 128):
        if n % cand == 0:
            lane = cand
            break
    if lane is None:
        # Rare fallback: pad the flat 1-D buffer to a lane multiple; the zero
        # padding contributes exactly 0 to the squared-error sum.
        lane = 128
        n_pad = _cdiv(n, lane) * lane
        o = jnp.pad(o, (0, n_pad - n))
        t = jnp.pad(t, (0, n_pad - n))
        n = n_pad

    n_rows = n // lane
    o2 = o.reshape(n_rows, lane)
    t2 = t.reshape(n_rows, lane)

    # ~2 MiB f32 blocks; row-tile is a multiple of 8, or the full row extent
    # (tiny inputs then run as a single block with no pipeline overhead).
    target_block_bytes = 2 * 1024 * 1024
    tile_rows = target_block_bytes // (lane * 4)
    if tile_rows >= n_rows:
        tile_rows = n_rows
    else:
        tile_rows = max(8, (tile_rows // 8) * 8)

    total_steps = _cdiv(n_rows, tile_rows)
    num_chunks = 2 if total_steps >= 2 else 1      # feed v7x's 2nd TensorCore
    spc = _cdiv(total_steps, num_chunks)           # steps per chunk

    needs_mask = (total_steps * tile_rows != n_rows) or (num_chunks * spc != total_steps)

    def in_map(c, k):
        # Clamp so the block start always lies inside the array; redundant
        # (clamped) blocks are fully masked out in the kernel.
        g = jnp.minimum(c * spc + k, total_steps - 1)
        return (g, 0)

    kernel = functools.partial(
        _center_loss_kernel,
        steps_per_chunk=spc, tile_rows=tile_rows, lane=lane,
        n_rows=n_rows, needs_mask=needs_mask)

    partials = pl.pallas_call(
        kernel,
        out_shape=jax.ShapeDtypeStruct((num_chunks, 8, 128), jnp.float32),
        grid_spec=pltpu.PrefetchScalarGridSpec(
            num_scalar_prefetch=0,
            grid=(num_chunks, spc),
            in_specs=[
                pl.BlockSpec((tile_rows, lane), in_map),
                pl.BlockSpec((tile_rows, lane), in_map),
            ],
            out_specs=pl.BlockSpec((1, 8, 128), lambda c, k: (c, 0, 0)),
            scratch_shapes=[pltpu.VMEM((tile_rows, lane), jnp.float32)],
        ),
        compiler_params=pltpu.CompilerParams(
            dimension_semantics=("parallel", "arbitrary"),
            vmem_limit_bytes=32 * 1024 * 1024,
        ),
    )(o2, t2)

    return jnp.sum(partials[:, 0, 0]) / jnp.float32(b)


if __name__ == "__main__":
    key = jax.random.PRNGKey(0)
    k1, k2 = jax.random.split(key)

    # Small NCHW-style shapes: batch=2, channels=4, spatial=16x16.
    outputs = jax.random.normal(k1, (2, 4, 16, 16), dtype=jnp.float32)
    targets = jax.random.normal(k2, (2, 4, 16, 16), dtype=jnp.float32)

    loss = center_loss(outputs, targets)
    loss = jax.block_until_ready(loss)

    # Reference check (plain JAX): sum MSE / batch.
    ref = jnp.sum((outputs - targets) ** 2) / outputs.shape[0]
    assert jnp.allclose(loss, ref, rtol=1e-5, atol=1e-5), (loss, ref)

    print("KERNEL_OK")
</pallas_src>

<mosaic_0001>
module attributes {stable_mosaic.version = 11 : i64} {
  func.func @_center_loss_kernel(%arg0: i32, %arg1: i32, %arg2: memref<4x512xf32, #tpu.memory_space<vmem>>, %arg3: memref<4x512xf32, #tpu.memory_space<vmem>>, %arg4: memref<1x8x128xf32, #tpu.memory_space<vmem>>, %arg5: memref<4x512xf32, #tpu.memory_space<vmem>>) attributes {dimension_semantics = [#tpu.dimension_semantics<parallel>, #tpu.dimension_semantics<arbitrary>], iteration_bounds = array<i64: 1, 1>, scalar_prefetch = 0 : i64, scratch_operands = 1 : i64, tpu.core_type = #tpu.core_type<tc>, window_params = [{transform_indices = @transform_0, window_bounds = array<i64: 4, 512>}, {transform_indices = @transform_1, window_bounds = array<i64: 4, 512>}, {transform_indices = @transform_2, window_bounds = array<i64: 1, 8, 128>}]} {
    %c0_i32 = arith.constant 0 : i32
    %0 = arith.cmpi eq, %arg1, %c0_i32 : i32
    %1 = arith.extui %0 : i1 to i32
    %c0_i32_0 = arith.constant 0 : i32
    %2 = arith.cmpi ne, %1, %c0_i32_0 : i32
    scf.if %2 {
      %cst = arith.constant 0.000000e+00 : f32
      %13 = vector.broadcast %cst : f32 to vector<4x512xf32>
      %c0_10 = arith.constant 0 : index
      %c0_11 = arith.constant 0 : index
      %14 = vector.load %arg5[%c0_10, %c0_11] : memref<4x512xf32, #tpu.memory_space<vmem>>, vector<4x512xf32>
      tpu.vector_store %arg5[%c0_10, %c0_11], %13 {strides = array<i32>} : memref<4x512xf32, #tpu.memory_space<vmem>>, vector<4x512xf32>,
    } else {
    }
    %c0 = arith.constant 0 : index
    %c0_1 = arith.constant 0 : index
    %3 = vector.load %arg2[%c0, %c0_1] : memref<4x512xf32, #tpu.memory_space<vmem>>, vector<4x512xf32>
    %c0_2 = arith.constant 0 : index
    %c0_3 = arith.constant 0 : index
    %4 = vector.load %arg3[%c0_2, %c0_3] : memref<4x512xf32, #tpu.memory_space<vmem>>, vector<4x512xf32>
    %5 = arith.subf %3, %4 : vector<4x512xf32>
    %c0_4 = arith.constant 0 : index
    %c0_5 = arith.constant 0 : index
    %6 = vector.load %arg5[%c0_4, %c0_5] : memref<4x512xf32, #tpu.memory_space<vmem>>, vector<4x512xf32>
    %7 = arith.mulf %5, %5 : vector<4x512xf32>
    %8 = arith.addf %6, %7 : vector<4x512xf32>
    %c0_6 = arith.constant 0 : index
    %c0_7 = arith.constant 0 : index
    %9 = vector.load %arg5[%c0_6, %c0_7] : memref<4x512xf32, #tpu.memory_space<vmem>>, vector<4x512xf32>
    tpu.vector_store %arg5[%c0_6, %c0_7], %8 {strides = array<i32>} : memref<4x512xf32, #tpu.memory_space<vmem>>, vector<4x512xf32>,
    %c0_i32_8 = arith.constant 0 : i32
    %10 = arith.cmpi eq, %arg1, %c0_i32_8 : i32
    %11 = arith.extui %10 : i1 to i32
    %c0_i32_9 = arith.constant 0 : i32
    %12 = arith.cmpi ne, %11, %c0_i32_9 : i32
    scf.if %12 {
      %c0_10 = arith.constant 0 : index
      %c0_11 = arith.constant 0 : index
      %13 = vector.load %arg5[%c0_10, %c0_11] : memref<4x512xf32, #tpu.memory_space<vmem>>, vector<4x512xf32>
      %14 = vector.shape_cast %13 : vector<4x512xf32> to vector<1x4x512xf32>
      %cst = arith.constant dense<0.000000e+00> : vector<1xf32>
      %15 = vector.multi_reduction <add>, %14, %cst [1, 2] : vector<1x4x512xf32> to vector<1xf32>
      %16 = vector.shape_cast %15 : vector<1xf32> to vector<1x1x1xf32>
      %17 = vector.extract %16[0, 0, 0] : f32 from vector<1x1x1xf32>
      %cst_12 = arith.constant 0.000000e+00 : f32
      %18 = vector.broadcast %cst_12 : f32 to vector<1x8x128xf32>
      %19 = vector.broadcast %17 : f32 to vector<1x8x128xf32>
      %20 = arith.addf %18, %19 : vector<1x8x128xf32>
      %c0_13 = arith.constant 0 : index
      %c0_14 = arith.constant 0 : index
      %c0_15 = arith.constant 0 : index
      %21 = vector.load %arg4[%c0_13, %c0_14, %c0_15] : memref<1x8x128xf32, #tpu.memory_space<vmem>>, vector<1x8x128xf32>
      tpu.vector_store %arg4[%c0_13, %c0_14, %c0_15], %20 {strides = array<i32>} : memref<1x8x128xf32, #tpu.memory_space<vmem>>, vector<1x8x128xf32>,
    } else {
    }
    return
  }
  func.func @transform_0(%arg0: i32, %arg1: i32) -> (i32, i32) {
    %c1_i32 = arith.constant 1 : i32
    %0 = arith.muli %arg0, %c1_i32 : i32
    %1 = arith.addi %0, %arg1 : i32
    %c0_i32 = arith.constant 0 : i32
    %2 = arith.minsi %1, %c0_i32 : i32
    %c0_i32_0 = arith.constant 0 : i32
    %c0_i32_1 = arith.constant 0 : i32
    return %2, %c0_i32_0 : i32, i32
  }
  func.func @transform_1(%arg0: i32, %arg1: i32) -> (i32, i32) {
    %c1_i32 = arith.constant 1 : i32
    %0 = arith.muli %arg0, %c1_i32 : i32
    %1 = arith.addi %0, %arg1 : i32
    %c0_i32 = arith.constant 0 : i32
    %2 = arith.minsi %1, %c0_i32 : i32
    %c0_i32_0 = arith.constant 0 : i32
    %c0_i32_1 = arith.constant 0 : i32
    return %2, %c0_i32_0 : i32, i32
  }
  func.func @transform_2(%arg0: i32, %arg1: i32) -> (i32, i32, i32) {
    %c0_i32 = arith.constant 0 : i32
    %c0_i32_0 = arith.constant 0 : i32
    %c0_i32_1 = arith.constant 0 : i32
    return %arg0, %c0_i32, %c0_i32_0 : i32, i32, i32
  }
}

</mosaic_0001>

<llo_original>
// kernel: tpu_custom_call.1
$region0: #{tpu_custom_call.1}
  #allocation0 [shape = 'u32[]', space=smem, size = 0x4, offset = 0x4, fixed_abs, tag = 'smem constant byte address 0x4 - core index']
  #allocation1 [shape = 'u32[72,128]{1,0:T(1,128)}', space=vmem, size = 0x9000, scoped, tag = 'internal scratch']
  #allocation2 [shape = 'f32[4,512]{1,0:T(4,128)}', space=vmem, size = 0x2000, scoped, tag = 'scratch operand']
  %s0 = inlined_call_operand.hbm [shape: f32[4,512], index: 0, kind: input, shape index: {}]
  %s1 = inlined_call_operand.hbm [shape: f32[4,512], index: 1, kind: input, shape index: {}]
  %s2 = inlined_call_operand.hbm [shape: f32[1,8,128], index: 2, kind: output, shape index: {}]
  %s3 = sld [smem:[#allocation0]]
  $region34: #{tpu_custom_call.1} parent=0
    _
  %s5 = ssub.s32 1, %s3
  %s6 = scalar_select 0, %s5, %s3
  $region1: #{tpu_custom_call.1} parent=0
    #allocation3 [shape = 'u8[8192]{0}', space=vmem, size = 0x2000, scoped, tag = 'input window, operand 0, single buffered']
    #allocation4 [shape = 's32[1]{0}', space=sflag, size = 0x4, scoped, tag = 'scoped memory for tpu_custom_call.1']
    #allocation5 [shape = 's32[1]{0}', space=sflag, size = 0x4, scoped, tag = 'scoped memory for tpu_custom_call.1']
    #allocation6 [shape = 'u8[8192]{0}', space=vmem, size = 0x2000, scoped, tag = 'input window, operand 1, single buffered']
    #allocation7 [shape = 's32[1]{0}', space=sflag, size = 0x4, scoped, tag = 'scoped memory for tpu_custom_call.1']
    #allocation8 [shape = 'u8[4096]{0}', space=vmem, size = 0x1000, scoped, tag = 'output window, operand 0, single buffered']
    %7 = vsyncpa [#allocation4], 0
    %8 = vsyncpa [#allocation7], 0
    %9 = vsyncpa [#allocation5], 0
    // Predicated region
    $region2: #{tpu_custom_call.1} parent=1 // pred_check
      _
    $region3: #{tpu_custom_call.1} parent=1 // pred_check_branch
      %11 = sbr.rel (0) target = $region5
    $region4: #{tpu_custom_call.1} parent=1 // pred_region
      %s12 = sadd.s32 0, 0
      %p13 = scmp.lt.s32.totalorder %s12, 0
      %s14 = scalar_select %p13, %s12, 0
      %16 = vsyncadd [#allocation4], 0
      %s17 = smul.addr %s14, 4
      %s18 = smul.addr %s17, 4
      %s19 = scalar_lea.hbm %s0, %s18
      %s21 = sshll.u32 %s19, 4
      %s22 = int_to_ptr.hbm [resolvable:$true] %s21
      %s23 = sshll.u32 [#allocation3], 4
      %s24 = int_to_ptr.vmem [resolvable:$true] %s23
      %26 = dma.hbm_to_vmem [thread:$0]  %s22, 256, %s24, [#allocation4]
    $region5: #{tpu_custom_call.1} parent=1 // pred_fallthru
      _
    // Predicated region
    $region6: #{tpu_custom_call.1} parent=1 // pred_check
      _
    $region7: #{tpu_custom_call.1} parent=1 // pred_check_branch
      %28 = sbr.rel (0) target = $region9
    $region8: #{tpu_custom_call.1} parent=1 // pred_region
      %s29 = sadd.s32 0, 0
      %p30 = scmp.lt.s32.totalorder %s29, 0
      %s31 = scalar_select %p30, %s29, 0
      %33 = vsyncadd [#allocation7], 0
      %s34 = smul.addr %s31, 4
      %s35 = smul.addr %s34, 4
      %s36 = scalar_lea.hbm %s1, %s35
      %s38 = sshll.u32 %s36, 4
      %s39 = int_to_ptr.hbm [resolvable:$true] %s38
      %s40 = sshll.u32 [#allocation6], 4
      %s41 = int_to_ptr.vmem [resolvable:$true] %s40
      %43 = dma.hbm_to_vmem [thread:$0]  %s39, 256, %s41, [#allocation7]
    $region9: #{tpu_custom_call.1} parent=1 // pred_fallthru
      _
    // Predicated region
    $region10: #{tpu_custom_call.1} parent=1 // pred_check
      _
    $region11: #{tpu_custom_call.1} parent=1 // pred_check_branch
      %45 = sbr.rel (0) target = $region13
    $region12: #{tpu_custom_call.1} parent=1 // pred_region
      %47 = dma.done [#allocation4], 256
    $region13: #{tpu_custom_call.1} parent=1 // pred_fallthru
      _
    // Predicated region
    $region14: #{tpu_custom_call.1} parent=1 // pred_check
      _
    $region15: #{tpu_custom_call.1} parent=1 // pred_check_branch
      %49 = sbr.rel (0) target = $region17
    $region16: #{tpu_custom_call.1} parent=1 // pred_region
      %51 = dma.done [#allocation7], 256
    $region17: #{tpu_custom_call.1} parent=1 // pred_fallthru
      _
    %s52 = sadd.s32 0, 0
    %p53 = scmp.lt.s32.totalorder %s52, 0
    %s54 = scalar_select %p53, %s52, 0
    %s55 = sadd.s32 0, 0
    %p56 = scmp.lt.s32.totalorder %s55, 0
    %s57 = scalar_select %p56, %s55, 0
    %p58 = scmp.eq.s32.totalorder 0, 0
    // Predicated region
    $region18: #{tpu_custom_call.1} parent=1 // pred_check
      %p59 = pneg %p58
    $region19: #{tpu_custom_call.1} parent=1 // pred_check_branch
      %61 = sbr.rel (%p59) target = $region21
    $region20: #{tpu_custom_call.1} parent=1 // pred_region
      %62 = vst [vmem:[#allocation2] sm:$0xff] 0.0
      %63 = vst [vmem:[#allocation2 + $0x8] sm:$0xff] 0.0
    $region21: #{tpu_custom_call.1} parent=1 // pred_fallthru
      _
    %v64 = vld [vmem:[#allocation3] sm:$0xff]
    %v65 = vld [vmem:[#allocation3 + $0x8] sm:$0xff]
    %v66 = vld [vmem:[#allocation6] sm:$0xff]
    %v67 = vld [vmem:[#allocation6 + $0x8] sm:$0xff]
    %v68 = vsub.f32 %v64, %v66
    %v69 = vsub.f32 %v65, %v67
    %v70 = vld [vmem:[#allocation2] sm:$0xff]
    %v71 = vld [vmem:[#allocation2 + $0x8] sm:$0xff]
    %v72 = vmul.f32 %v68, %v68
    %v73 = vmul.f32 %v69, %v69
    %v74 = vadd.f32 %v70, %v72
    %v75 = vadd.f32 %v71, %v73
    %76 = vst [vmem:[#allocation2] sm:$0xff] %v74
    %77 = vst [vmem:[#allocation2 + $0x8] sm:$0xff] %v75
    // Predicated region
    $region22: #{tpu_custom_call.1} parent=1 // pred_check
      %p78 = pneg %p58
    $region23: #{tpu_custom_call.1} parent=1 // pred_check_branch
      %80 = sbr.rel (%p78) target = $region25
    $region24: #{tpu_custom_call.1} parent=1 // pred_region
      %v81 = vld [vmem:[#allocation2] sm:$0xff]
      %v82 = vld [vmem:[#allocation2 + $0x8] sm:$0xff]
      %85 = vst [vmem:[#allocation1] ss:$2 sm:$0xff] %v81
      %s86 = scalar_lea.vmem [#allocation1], 16
      %87 = vst [vmem:[%s86] ss:$2 sm:$0xff] %v82
      %v88 = vld.sshfl [vmem:[#allocation1] sm:$0xff pattern:$0x75316420]
      %v89 = vld.sshfl [vmem:[#allocation1 + $0x8] sm:$0xff pattern:$0x75316420]
      %v90 = vld.sshfl [vmem:[#allocation1 + $0x10] sm:$0xff pattern:$0x75316420]
      %v91 = vld.sshfl [vmem:[#allocation1 + $0x18] sm:$0xff pattern:$0x75316420]
      %vm96 = vcmask 1043456
      %v97 = vsel %vm96, %v88, 0.0
      %v98 = vsel %vm96, %v89, 0.0
      %v99 = vadd.f32 %v97, %v98
      %v100 = vsel %vm96, %v90, 0.0
      %v101 = vadd.f32 %v99, %v100
      %v102 = vsel %vm96, %v91, 0.0
      %v103 = vadd.f32 %v101, %v102
      %104 = vadd.xlane.f32.xlu0 %v103
      %v105 = vpop.xlane.xlu0 %104
      %v106 = vrot.slane %v105, 4
      %v107 = vadd.f32 %v105, %v106
      %v108 = vrot.slane %v107, 2
      %v109 = vadd.f32 %v107, %v108
      %v110 = vrot.slane %v109, 1
      %v111 = vadd.f32 %v109, %v110
      %s112 = vtos %v111
      %v113 = vstv %s112
      %v114 = vadd.f32 %v113, 0.0
      %115 = vst [vmem:[#allocation8] sm:$0xff] %v114
    $region25: #{tpu_custom_call.1} parent=1 // pred_fallthru
      _
    // Predicated region
    $region26: #{tpu_custom_call.1} parent=1 // pred_check
      _
    $region27: #{tpu_custom_call.1} parent=1 // pred_check_branch
      %117 = sbr.rel (0) target = $region29
    $region28: #{tpu_custom_call.1} parent=1 // pred_region
      %119 = vsyncadd [#allocation5], 0
      %s121 = sshll.u32 [#allocation8], 4
      %s122 = int_to_ptr.vmem [resolvable:$true] %s121
      %s123 = sshll.u32 %s2, 4
      %s124 = int_to_ptr.hbm [resolvable:$true] %s123
      %126 = dma.vmem_to_hbm [thread:$0]  %s122, 128, %s124, [#allocation5]
    $region29: #{tpu_custom_call.1} parent=1 // pred_fallthru
      _
    // Predicated region
    $region30: #{tpu_custom_call.1} parent=1 // pred_check
      _
    $region31: #{tpu_custom_call.1} parent=1 // pred_check_branch
      %128 = sbr.rel (0) target = $region33
    $region32: #{tpu_custom_call.1} parent=1 // pred_region
      %130 = dma.done [#allocation5], 128
    $region33: #{tpu_custom_call.1} parent=1 // pred_fallthru
      _
    %131 = vsyncpa [#allocation4], 1
    %132 = vsyncpa [#allocation7], 1
    %133 = vsyncpa [#allocation5], 1

</llo_original>
